<compile_context>
chip_gen: v7x
topology: tpu7x:2x2x1
jax: 0.10.0
libtpu: 0.0.40
codegen_flags: <defaults>
</compile_context>

<pallas_src>
import jax
import jax.numpy as jnp
from jax.experimental import pallas as pl
from jax.experimental.pallas import tpu as pltpu


def _round_up(x, m):
    return ((x + m - 1) // m) * m


# -----------------------------------------------------------------------------
# Kernel 1: VMEM-resident table (small / medium vocabularies).
# -----------------------------------------------------------------------------
def _vmem_table_gather_kernel(ids_ref, table_ref, out_ref):
    """Gather one tile of TB token rows from a VMEM-resident embedding table.

    ids_ref:   (N_pad,) int32 in SMEM (scalar prefetch) -- addressing only.
    table_ref: (V, D) table block in VMEM; constant index_map means it is DMA'd
               from HBM once and revisited (not re-fetched) on later grid steps.
    out_ref:   (TB, D) output block for this grid step.
    """
    tb = out_ref.shape[0]
    base = pl.program_id(0) * tb

    @pl.loop(0, tb)
    def _copy_row(t):
        idx = ids_ref[base + t]
        out_ref[pl.ds(t, 1), :] = table_ref[pl.ds(idx, 1), :]
    # TODO(synk): for D < 128, pack P = 128 // D tokens per 128-lane output slab
    # so per-row stores become unmasked vst instead of vst.msk on D lanes.


# -----------------------------------------------------------------------------
# Kernel 2: HBM row gather (vocabularies too large for a resident VMEM table).
# -----------------------------------------------------------------------------
def _hbm_row_gather_kernel(ids_ref, table_hbm_ref, out_ref, row_buf, sem):
    """Batched row-gather DMAs from an HBM-resident table.

    ids_ref:       (N_pad,) int32 in SMEM (scalar prefetch).
    table_hbm_ref: (V, D) table left in HBM (memory_space=pl.ANY).
    out_ref:       (TB, D) output block.
    row_buf:       (TB, D) VMEM scratch the row DMAs land in.
    sem:           (TB,) DMA semaphores, one per in-flight row copy.
    """
    tb = out_ref.shape[0]
    base = pl.program_id(0) * tb

    @pl.loop(0, tb)
    def _issue(t):
        idx = ids_ref[base + t]
        pltpu.make_async_copy(
            table_hbm_ref.at[pl.ds(idx, 1)], row_buf.at[pl.ds(t, 1)], sem.at[t]
        ).start()

    @pl.loop(0, tb)
    def _drain(t):
        pltpu.make_async_copy(
            table_hbm_ref.at[pl.ds(0, 1)], row_buf.at[pl.ds(t, 1)], sem.at[t]
        ).wait()

    out_ref[...] = row_buf[...]  # one dense (TB, D) store
    # TODO(synk): double-buffer row_buf ((2, TB, D)) and prefetch the next token
    # block's row DMAs while this block is stored, to hide HBM latency further.


# -----------------------------------------------------------------------------
# Wrapper
# -----------------------------------------------------------------------------
def embedding_lookup(ids, table, *, gather_from_hbm=None, tokens_per_block=None,
                     max_vmem_table_bytes=12 * 1024 * 1024):
    """Embedding gather: ids (B, T) int, table (V, D) -> (B, T, D).

    Chooses between a VMEM-resident table (single HBM read of the table) and a
    batched HBM row-gather, based on the table size.
    """
    B, T = ids.shape
    V, D = table.shape
    N = B * T
    itemsize = table.dtype.itemsize
    table_bytes = V * D * itemsize

    if gather_from_hbm is None:
        # Keep the resident-table path well under the smallest scoped-VMEM
        # default (v5e: 16 MiB; v7x: 32 MiB of 64 MiB physical), leaving room
        # for the double-buffered (TB, D) output blocks.
        gather_from_hbm = table_bytes > max_vmem_table_bytes
    if tokens_per_block is None:
        tokens_per_block = 64 if gather_from_hbm else 256

    tb = min(_round_up(int(tokens_per_block), 8), _round_up(N, 8))
    n_pad = _round_up(N, tb)
    grid = (n_pad // tb,)

    # torch.nn.Embedding raises on out-of-range ids; a hardware gather would
    # silently read an arbitrary row, so clamp into [0, V-1] (V-1 is the
    # all-zero padding_idx row).  Grid-padding tokens also map to that row and
    # are sliced off afterwards.
    flat_ids = jnp.clip(ids.reshape(N).astype(jnp.int32), 0, V - 1)
    flat_ids = jnp.pad(flat_ids, (0, n_pad - N), constant_values=V - 1)

    out_spec = pl.BlockSpec((tb, D), lambda i, id_ref: (i, 0))
    out_shape = jax.ShapeDtypeStruct((n_pad, D), table.dtype)
    # TODO(synk): use pltpu.CORE_PARALLEL on this axis on v7x so both
    # TensorCores split token blocks; "parallel" is safe on 1-TC v5e/v6e.
    params = pltpu.CompilerParams(dimension_semantics=("parallel",))

    if gather_from_hbm:
        grid_spec = pltpu.PrefetchScalarGridSpec(
            num_scalar_prefetch=1,
            grid=grid,
            in_specs=[pl.BlockSpec(memory_space=pl.ANY)],   # table stays in HBM
            out_specs=out_spec,
            scratch_shapes=[pltpu.VMEM((tb, D), table.dtype),
                            pltpu.SemaphoreType.DMA((tb,))],
        )
        bytes_moved = n_pad * 4 + 2 * n_pad * D * itemsize
        kernel = _hbm_row_gather_kernel
    else:
        grid_spec = pltpu.PrefetchScalarGridSpec(
            num_scalar_prefetch=1,
            grid=grid,
            # Constant index_map: the (V, D) table is DMA'd into VMEM once and
            # revisited (not re-fetched) by every token block.
            in_specs=[pl.BlockSpec((V, D), lambda i, id_ref: (0, 0))],
            out_specs=out_spec,
        )
        bytes_moved = n_pad * 4 + table_bytes + n_pad * D * itemsize
        kernel = _vmem_table_gather_kernel

    cost = pl.CostEstimate(flops=0, transcendentals=0,
                           bytes_accessed=int(bytes_moved))

    out_flat = pl.pallas_call(
        kernel,
        out_shape=out_shape,
        grid_spec=grid_spec,
        compiler_params=params,
        cost_estimate=cost,
    )(flat_ids, table)

    return out_flat[:N].reshape(B, T, D)


def make_word_embedding_params(ntoken, emb_dim, key):
    """Synthetic init of nn.Embedding(ntoken+1, emb_dim, padding_idx=ntoken)."""
    # TODO(synk): init_embedding() loads GloVe weights from disk (file I/O); not
    # reproduced here -- use deterministic random weights instead.
    # TODO(synk): a bf16 table would halve HBM traffic both directions; kept f32
    # to match torch.nn.Embedding's default dtype.
    V = ntoken + 1
    table = jax.random.normal(key, (V, emb_dim), dtype=jnp.float32) * 0.1
    table = table.at[ntoken].set(0.0)     # padding_idx row is zero
    return table


def word_embedding_forward(x, table, dropout_p=0.0, training=False):
    """Reproduces WordEmbedding.forward.

    Returns (module_output, emb):
      module_output == dropout(x)  -- identity in eval mode; exactly what the
                                      PyTorch code returns (dropout is applied
                                      to the integer indices x, not to emb).
      emb           == table[x]    -- the value the original code computes via
                                      nn.Embedding and then discards (Pallas gather).
    """
    emb = embedding_lookup(x, table)      # the hot path
    # TODO(synk): training-mode nn.Dropout on integer indices errors in PyTorch;
    # only the eval-mode (identity) path is meaningful and reproduced here.
    del dropout_p, training
    module_output = x                     # dropout(x) in eval mode
    return module_output, emb


if __name__ == "__main__":
    ntoken, emb_dim = 127, 32             # V = 128, D = 32
    B, T = 2, 8

    key = jax.random.PRNGKey(0)
    k_tab, k_ids, k_ids2 = jax.random.split(key, 3)
    table = make_word_embedding_params(ntoken, emb_dim, k_tab)

    # token ids in [0, ntoken]; include the padding index explicitly.
    x = jax.random.randint(k_ids, (B, T), 0, ntoken + 1, dtype=jnp.int32)
    x = x.at[0, -1].set(ntoken)           # one padding token

    # 1) Module forward (auto path: VMEM-resident table, single grid step).
    out, emb = word_embedding_forward(x, table)
    # 2) Forced HBM row-gather path (what a huge vocabulary would use).
    emb_hbm = embedding_lookup(x, table, gather_from_hbm=True)
    # 3/4) Multi-block grids (tokens_per_block=8 -> grid=(2,)) on both paths.
    emb_multi = embedding_lookup(x, table, tokens_per_block=8)
    emb_multi_hbm = embedding_lookup(x, table, gather_from_hbm=True,
                                     tokens_per_block=8)
    # 5) Ragged N (needs grid padding).
    x2 = jax.random.randint(k_ids2, (2, 5), 0, ntoken + 1, dtype=jnp.int32)
    emb_ragged = embedding_lookup(x2, table)

    out = jax.block_until_ready(out)
    emb = jax.block_until_ready(emb)
    emb_hbm = jax.block_until_ready(emb_hbm)
    emb_multi = jax.block_until_ready(emb_multi)
    emb_multi_hbm = jax.block_until_ready(emb_multi_hbm)
    emb_ragged = jax.block_until_ready(emb_ragged)

    # Correctness checks against pure-JAX references.
    emb_ref = table[x]                    # torch: self.emb(x)
    emb_ref2 = table[x2]
    assert emb.shape == (B, T, emb_dim)
    assert jnp.allclose(emb, emb_ref, atol=1e-6), "embedding mismatch (VMEM path)"
    assert jnp.allclose(emb_hbm, emb_ref, atol=1e-6), "embedding mismatch (HBM path)"
    assert jnp.allclose(emb_multi, emb_ref, atol=1e-6), "mismatch (VMEM, grid>1)"
    assert jnp.allclose(emb_multi_hbm, emb_ref, atol=1e-6), "mismatch (HBM, grid>1)"
    assert jnp.allclose(emb_ragged, emb_ref2, atol=1e-6), "mismatch (ragged N)"
    assert jnp.all(emb[0, -1] == 0.0), "padding_idx row must be zero"
    assert jnp.array_equal(out, x), "module output must equal dropout(x) == x (eval)"

    print("KERNEL_OK")
</pallas_src>

<mosaic_0001>
module attributes {stable_mosaic.version = 11 : i64} {
  func.func @_vmem_table_gather_kernel(%arg0: i32, %arg1: memref<16xi32, #tpu.memory_space<smem>>, %arg2: memref<128x32xf32, #tpu.memory_space<vmem>>, %arg3: memref<16x32xf32, #tpu.memory_space<vmem>>) attributes {dimension_semantics = [#tpu.dimension_semantics<parallel>], iteration_bounds = array<i64: 1>, scalar_prefetch = 1 : i64, scratch_operands = 0 : i64, tpu.core_type = #tpu.core_type<tc>, window_params = [{pipeline_mode = #tpu.pipeline_mode<synchronous>, transform_indices = @transform_0, window_bounds = array<i64: 128, 32>}, {transform_indices = @transform_1, window_bounds = array<i64: 16, 32>}]} {
    %c16_i32 = arith.constant 16 : i32
    %0 = arith.muli %arg0, %c16_i32 : i32
    %c0_i32 = arith.constant 0 : i32
    %c16_i32_0 = arith.constant 16 : i32
    %1 = arith.addi %c0_i32, %c16_i32_0 : i32
    %c1_i32 = arith.constant 1 : i32
    scf.for %arg4 = %c0_i32 to %1 step %c1_i32  : i32 {
      %c1_i32_2 = arith.constant 1 : i32
      %2 = arith.muli %arg4, %c1_i32_2 : i32
      %c0_i32_3 = arith.constant 0 : i32
      %3 = arith.addi %c0_i32_3, %2 : i32
      %4 = arith.addi %0, %3 : i32
      %5 = arith.index_cast %4 : i32 to index
      %6 = memref.load %arg1[%5] : memref<16xi32, #tpu.memory_space<smem>>
      %7 = arith.index_cast %6 : i32 to index
      %c0 = arith.constant 0 : index
      %8 = vector.load %arg2[%7, %c0] : memref<128x32xf32, #tpu.memory_space<vmem>>, vector<1x32xf32>
      %9 = arith.index_cast %3 : i32 to index
      %c0_4 = arith.constant 0 : index
      %10 = vector.load %arg3[%9, %c0_4] : memref<16x32xf32, #tpu.memory_space<vmem>>, vector<1x32xf32>
      tpu.vector_store %arg3[%9, %c0_4], %8 {strides = array<i32>} : memref<16x32xf32, #tpu.memory_space<vmem>>, vector<1x32xf32>,
    }
    %c16_i32_1 = arith.constant 16 : i32
    return
  }
  func.func @transform_0(%arg0: i32, %arg1: memref<16xi32, #tpu.memory_space<smem>>) -> (i32, i32) {
    %c0_i32 = arith.constant 0 : i32
    %c0_i32_0 = arith.constant 0 : i32
    %c0_i32_1 = arith.constant 0 : i32
    return %c0_i32, %c0_i32_0 : i32, i32
  }
  func.func @transform_1(%arg0: i32, %arg1: memref<16xi32, #tpu.memory_space<smem>>) -> (i32, i32) {
    %c0_i32 = arith.constant 0 : i32
    %c0_i32_0 = arith.constant 0 : i32
    return %arg0, %c0_i32 : i32, i32
  }
}

</mosaic_0001>

<llo_original>
// kernel: tpu_custom_call.1
$region0: #{tpu_custom_call.1}
  #allocation0 [shape = 'u32[]', space=smem, size = 0x4, offset = 0x4, fixed_abs, tag = 'smem constant byte address 0x4 - core index']
  #allocation1 [shape = 'u32[144,128]{1,0:T(1,128)}', space=vmem, size = 0x12000, scoped, tag = 'internal scratch']
  #allocation2 [shape = 's32[1]{0}', space=sflag, size = 0x4, scoped, tag = 'scoped memory for tpu_custom_call.1']
  #allocation3 [shape = 'u8[512]{0}', space=smem, size = 0x200, scoped, tag = 'prefetched SMEM operand 0']
  %s0 = inlined_call_operand.vmem [shape: s32[16], index: 0, kind: input, shape index: {}]
  %s1 = inlined_call_operand.vmem [shape: f32[128,32], index: 1, kind: input, shape index: {}]
  %s2 = inlined_call_operand.hbm [shape: f32[16,32], index: 2, kind: output, shape index: {}]
  %s3 = sld [smem:[#allocation0]]
  $region21: #{tpu_custom_call.1} parent=0
    _
  %s5 = ssub.s32 1, %s3
  %s6 = scalar_select 0, %s5, %s3
  %s7 = sshll.u32 %s0, 4
  %s8 = int_to_ptr.vmem [resolvable:$true] %s7
  %10 = dma.vmem_to_smem %s8, 16, [#allocation3], [#allocation2]
  %11 = dma.done [#allocation2], 16
  %12 = sfence
  $region1: #{tpu_custom_call.1} parent=0
    #allocation4 [shape = 'u8[8192]{0}', space=vmem, size = 0x2000, scoped, tag = 'output window, operand 0, single buffered']
    #allocation5 [shape = 's32[1]{0}', space=sflag, size = 0x4, scoped, tag = 'scoped memory for tpu_custom_call.1']
    %13 = vsyncpa [#allocation5], 0
    // Predicated region
    $region2: #{tpu_custom_call.1} parent=1 // pred_check
      _
    $region3: #{tpu_custom_call.1} parent=1 // pred_check_branch
      %15 = sbr.rel (0) target = $region5
    $region4: #{tpu_custom_call.1} parent=1 // pred_region
      _
    $region5: #{tpu_custom_call.1} parent=1 // pred_fallthru
      _
    %s16 = smul.u32 0, 16
    loop: start=0, step=1, limit=16
    $region6: #{tpu_custom_call.1} parent=1 // loop_pre_header
      _
    $region7: #{tpu_custom_call.1} parent=1 // loop_header
      %s18 = sphi 0, %s22
      %p19 = scmp.ge.s32.totalorder %s18, 16
    $region8: #{tpu_custom_call.1} parent=1 // loop_header_branch
      %21 = sbr.rel (%p19) target = $region12
    $region9: #{tpu_custom_call.1} parent=1 // loop_body
      %s23 = sadd.s32 %s16, %s18
      %s24 = sld [smem:[#allocation3 + %s23]]
      %s25 = scalar_lea.vmem %s1, %s24
      %v26 = vld [vmem:[%s25] sm:$0x1]
      %s27 = scalar_lea.vmem [#allocation4], %s18
      %vm28 = vcmask 253952
      %29 = vst.msk [vmem:[%s27] sm:$0x1] %vm28, %v26
    $region10: #{tpu_custom_call.1} parent=1 // loop_footer
      %s22 = sadd.s32 1, %s18
    $region11: #{tpu_custom_call.1} parent=1 // loop_footer_branch
      %17 = sbr.rel target = $region7
    $region12: #{tpu_custom_call.1} parent=1 // loop_exit
      _
    // Predicated region
    $region13: #{tpu_custom_call.1} parent=1 // pred_check
      _
    $region14: #{tpu_custom_call.1} parent=1 // pred_check_branch
      %31 = sbr.rel (0) target = $region16
    $region15: #{tpu_custom_call.1} parent=1 // pred_region
      %s33 = ssub.s32 256, 256
      %34 = vsyncadd [#allocation5], %s33
      %s35 = sshll.u32 [#allocation4], 4
      %s36 = int_to_ptr.vmem [resolvable:$true] %s35
      %41 = dma.vmem_to_hbm [thread:$0]  %s36, 256, %s2, [#allocation5], 128, 128, 8
    $region16: #{tpu_custom_call.1} parent=1 // pred_fallthru
      _
    // Predicated region
    $region17: #{tpu_custom_call.1} parent=1 // pred_check
      _
    $region18: #{tpu_custom_call.1} parent=1 // pred_check_branch
      %43 = sbr.rel (0) target = $region20
    $region19: #{tpu_custom_call.1} parent=1 // pred_region
      %44 = dma.done [#allocation5], 256
    $region20: #{tpu_custom_call.1} parent=1 // pred_fallthru
      _
    %45 = vsyncpa [#allocation5], 1

</llo_original>
